<compile_context>
chip_gen: v6e
topology: v6e:2x2x1
jax: 0.10.0
libtpu: 0.0.40
codegen_flags: <defaults>
</compile_context>

<pallas_src>
import math

import jax
import jax.numpy as jnp
from jax.experimental import pallas as pl
from jax.experimental.pallas import tpu as pltpu


# ============================ Pallas kernel ============================

def _greedy_argmax_kernel(x_ref, o_ref, m_sc, i_sc):
    """x_ref: (row_block, vocab_tile) logits tile.
    o_ref: (row_block, 1) int32 token ids (written on last vocab tile).
    m_sc:  (row_block, 1) f32 running max scratch.
    i_sc:  (row_block, 1) int32 running argmax scratch.
    """
    k = pl.program_id(1)
    n_k = pl.num_programs(1)
    vocab_tile = x_ref.shape[-1]

    x = x_ref[...]                                            # input dtype (bf16/f32)
    tile_max = jnp.max(x, axis=-1, keepdims=True)             # (rb, 1), XLU reduce
    col = jax.lax.broadcasted_iota(jnp.int32, x.shape, dimension=1) + k * vocab_tile
    sentinel = jnp.int32(n_k * vocab_tile)                    # larger than any real index
    cand = jnp.where(x == tile_max, col, sentinel)
    tile_arg = jnp.min(cand, axis=-1, keepdims=True)          # first max within tile
    tile_max_f32 = tile_max.astype(jnp.float32)               # exact widening

    @pl.when(k == 0)
    def _():
        m_sc[...] = tile_max_f32
        i_sc[...] = tile_arg

    @pl.when(k > 0)
    def _():
        prev_max = m_sc[...]
        better = tile_max_f32 > prev_max                      # strict > keeps first max
        m_sc[...] = jnp.where(better, tile_max_f32, prev_max)
        i_sc[...] = jnp.where(better, tile_arg, i_sc[...])

    @pl.when(k == n_k - 1)
    def _():
        o_ref[...] = i_sc[...]


# ============================ wrapper ============================

def _round_up(x, m):
    return ((x + m - 1) // m) * m


def greedy_head(m_logits, row_block=256, vocab_tile=2048):
    """Arg-max token indices, shape m_logits.shape[:-1] + (1,), dtype int32."""
    orig_shape = m_logits.shape
    vocab = orig_shape[-1]
    rows = math.prod(orig_shape[:-1]) if len(orig_shape) > 1 else 1
    x = m_logits.reshape(rows, vocab)
    dtype = x.dtype
    dtype_bytes = jnp.dtype(dtype).itemsize

    # ---- tile selection: sublane-multiple rows, lane-multiple vocab ----
    rb = _round_up(min(row_block, _round_up(rows, 8)), 8)
    vt = _round_up(min(vocab_tile, _round_up(vocab, 128)), 128)
    rows_p = _round_up(rows, rb)
    vocab_p = _round_up(vocab, vt)

    # Pad: vocab padding uses the most-negative finite value so it never wins
    # the argmax; padded rows are discarded after the call.
    if rows_p != rows or vocab_p != vocab:
        pad_val = float(jnp.finfo(dtype).min)
        x = jnp.pad(x, ((0, rows_p - rows), (0, vocab_p - vocab)),
                    constant_values=pad_val)

    grid = (rows_p // rb, vocab_p // vt)

    out = pl.pallas_call(
        _greedy_argmax_kernel,
        out_shape=jax.ShapeDtypeStruct((rows_p, 1), jnp.int32),
        grid_spec=pltpu.PrefetchScalarGridSpec(
            num_scalar_prefetch=0,
            grid=grid,
            in_specs=[pl.BlockSpec((rb, vt), lambda i, k: (i, k))],
            out_specs=pl.BlockSpec((rb, 1), lambda i, k: (i, 0)),
            scratch_shapes=[pltpu.VMEM((rb, 1), jnp.float32),
                            pltpu.VMEM((rb, 1), jnp.int32)],
        ),
        compiler_params=pltpu.CompilerParams(
            dimension_semantics=("parallel", "arbitrary")),
        cost_estimate=pl.CostEstimate(
            flops=2 * rows_p * vocab_p,
            transcendentals=0,
            bytes_accessed=rows_p * vocab_p * dtype_bytes + rows_p * 4),
    )(x)

    out = out[:rows]
    return out.reshape(*orig_shape[:-1], 1)


# ============================ main ============================

if __name__ == "__main__":
    key = jax.random.PRNGKey(0)
    k_f32, k_bf16 = jax.random.split(key)

    # Small shapes consistent with the module: (batch, seq, vocab) logits.
    B, S, VOCAB = 2, 8, 2048
    m_logits = jax.random.normal(k_f32, (B, S, VOCAB), dtype=jnp.float32)

    token = greedy_head(m_logits)
    jax.block_until_ready(token)

    ref = jnp.argmax(m_logits.astype(jnp.float32), axis=-1)[..., None].astype(jnp.int32)
    assert token.shape == (B, S, 1)
    assert token.dtype == jnp.int32
    assert jnp.array_equal(token, ref)

    # bf16 logits with non-multiple-of-128 vocab and non-multiple-of-8 rows:
    # exercises the row/vocab padding path and the in-kernel dtype handling.
    B2, VOCAB2 = 3, 1000
    m_logits_bf16 = jax.random.normal(k_bf16, (B2, VOCAB2), dtype=jnp.bfloat16)
    token2 = greedy_head(m_logits_bf16)
    jax.block_until_ready(token2)
    ref2 = jnp.argmax(m_logits_bf16.astype(jnp.float32), axis=-1)[..., None].astype(jnp.int32)
    assert token2.shape == (B2, 1)
    assert jnp.array_equal(token2, ref2)

    # Exercise the multi-tile reduction path (vocab split across several tiles).
    B3, S3, VOCAB3 = 2, 16, 8192
    m_logits3 = jax.random.normal(jax.random.PRNGKey(1), (B3, S3, VOCAB3), dtype=jnp.float32)
    token3 = greedy_head(m_logits3, row_block=32, vocab_tile=2048)
    jax.block_until_ready(token3)
    ref3 = jnp.argmax(m_logits3, axis=-1)[..., None].astype(jnp.int32)
    assert jnp.array_equal(token3, ref3)

    print("KERNEL_OK")
</pallas_src>

<mosaic_0001>
module attributes {stable_mosaic.version = 11 : i64} {
  func.func @_greedy_argmax_kernel(%arg0: i32, %arg1: i32, %arg2: memref<16x2048xf32, #tpu.memory_space<vmem>>, %arg3: memref<16x1xi32, #tpu.memory_space<vmem>>, %arg4: memref<16x1xf32, #tpu.memory_space<vmem>>, %arg5: memref<16x1xi32, #tpu.memory_space<vmem>>) attributes {dimension_semantics = [#tpu.dimension_semantics<parallel>, #tpu.dimension_semantics<arbitrary>], iteration_bounds = array<i64: 1, 1>, scalar_prefetch = 0 : i64, scratch_operands = 2 : i64, tpu.core_type = #tpu.core_type<tc>, window_params = [{transform_indices = @transform_0, window_bounds = array<i64: 16, 2048>}, {transform_indices = @transform_1, window_bounds = array<i64: 16, 1>}]} {
    %c0 = arith.constant 0 : index
    %c0_0 = arith.constant 0 : index
    %0 = vector.load %arg2[%c0, %c0_0] : memref<16x2048xf32, #tpu.memory_space<vmem>>, vector<16x2048xf32>
    %cst = arith.constant dense<0xFF800000> : vector<16xf32>
    %1 = vector.multi_reduction <maximumf>, %0, %cst [1] : vector<16x2048xf32> to vector<16xf32>
    %2 = vector.shape_cast %1 : vector<16xf32> to vector<16x1xf32>
    %3 = tpu.iota {dimensions = array<i32: 1>} : vector<16x2048xi32>
    %c2048_i32 = arith.constant 2048 : i32
    %4 = arith.muli %arg1, %c2048_i32 : i32
    %5 = vector.broadcast %4 : i32 to vector<16x2048xi32>
    %6 = arith.addi %3, %5 : vector<16x2048xi32>
    %7 = vector.broadcast %2 : vector<16x1xf32> to vector<16x2048xf32>
    %8 = arith.cmpf oeq, %0, %7 : vector<16x2048xf32>
    %c2048_i32_1 = arith.constant 2048 : i32
    %9 = vector.broadcast %c2048_i32_1 : i32 to vector<16x2048xi32>
    %10 = arith.select %8, %6, %9 : vector<16x2048xi1>, vector<16x2048xi32>
    %cst_2 = arith.constant dense<2147483647> : vector<16xi32>
    %11 = vector.multi_reduction <minsi>, %10, %cst_2 [1] : vector<16x2048xi32> to vector<16xi32>
    %12 = vector.shape_cast %11 : vector<16xi32> to vector<16x1xi32>
    %c0_i32 = arith.constant 0 : i32
    %13 = arith.cmpi eq, %arg1, %c0_i32 : i32
    %14 = arith.extui %13 : i1 to i32
    %c0_i32_3 = arith.constant 0 : i32
    %15 = arith.cmpi ne, %14, %c0_i32_3 : i32
    scf.if %15 {
      %c0_8 = arith.constant 0 : index
      %c0_9 = arith.constant 0 : index
      %22 = vector.load %arg4[%c0_8, %c0_9] : memref<16x1xf32, #tpu.memory_space<vmem>>, vector<16x1xf32>
      tpu.vector_store %arg4[%c0_8, %c0_9], %2 {strides = array<i32>} : memref<16x1xf32, #tpu.memory_space<vmem>>, vector<16x1xf32>,
      %c0_10 = arith.constant 0 : index
      %c0_11 = arith.constant 0 : index
      %23 = vector.load %arg5[%c0_10, %c0_11] : memref<16x1xi32, #tpu.memory_space<vmem>>, vector<16x1xi32>
      tpu.vector_store %arg5[%c0_10, %c0_11], %12 {strides = array<i32>} : memref<16x1xi32, #tpu.memory_space<vmem>>, vector<16x1xi32>,
    } else {
    }
    %c0_i32_4 = arith.constant 0 : i32
    %16 = arith.cmpi sgt, %arg1, %c0_i32_4 : i32
    %17 = arith.extui %16 : i1 to i32
    %c0_i32_5 = arith.constant 0 : i32
    %18 = arith.cmpi ne, %17, %c0_i32_5 : i32
    scf.if %18 {
      %c0_8 = arith.constant 0 : index
      %c0_9 = arith.constant 0 : index
      %22 = vector.load %arg4[%c0_8, %c0_9] : memref<16x1xf32, #tpu.memory_space<vmem>>, vector<16x1xf32>
      %23 = arith.cmpf ogt, %2, %22 : vector<16x1xf32>
      %24 = arith.select %23, %2, %22 : vector<16x1xi1>, vector<16x1xf32>
      %c0_10 = arith.constant 0 : index
      %c0_11 = arith.constant 0 : index
      %25 = vector.load %arg4[%c0_10, %c0_11] : memref<16x1xf32, #tpu.memory_space<vmem>>, vector<16x1xf32>
      tpu.vector_store %arg4[%c0_10, %c0_11], %24 {strides = array<i32>} : memref<16x1xf32, #tpu.memory_space<vmem>>, vector<16x1xf32>,
      %c0_12 = arith.constant 0 : index
      %c0_13 = arith.constant 0 : index
      %26 = vector.load %arg5[%c0_12, %c0_13] : memref<16x1xi32, #tpu.memory_space<vmem>>, vector<16x1xi32>
      %27 = arith.select %23, %12, %26 : vector<16x1xi1>, vector<16x1xi32>
      %c0_14 = arith.constant 0 : index
      %c0_15 = arith.constant 0 : index
      %28 = vector.load %arg5[%c0_14, %c0_15] : memref<16x1xi32, #tpu.memory_space<vmem>>, vector<16x1xi32>
      tpu.vector_store %arg5[%c0_14, %c0_15], %27 {strides = array<i32>} : memref<16x1xi32, #tpu.memory_space<vmem>>, vector<16x1xi32>,
    } else {
    }
    %c0_i32_6 = arith.constant 0 : i32
    %19 = arith.cmpi eq, %arg1, %c0_i32_6 : i32
    %20 = arith.extui %19 : i1 to i32
    %c0_i32_7 = arith.constant 0 : i32
    %21 = arith.cmpi ne, %20, %c0_i32_7 : i32
    scf.if %21 {
      %c0_8 = arith.constant 0 : index
      %c0_9 = arith.constant 0 : index
      %22 = vector.load %arg5[%c0_8, %c0_9] : memref<16x1xi32, #tpu.memory_space<vmem>>, vector<16x1xi32>
      %c0_10 = arith.constant 0 : index
      %c0_11 = arith.constant 0 : index
      %23 = vector.load %arg3[%c0_10, %c0_11] : memref<16x1xi32, #tpu.memory_space<vmem>>, vector<16x1xi32>
      tpu.vector_store %arg3[%c0_10, %c0_11], %22 {strides = array<i32>} : memref<16x1xi32, #tpu.memory_space<vmem>>, vector<16x1xi32>,
    } else {
    }
    return
  }
  func.func @transform_0(%arg0: i32, %arg1: i32) -> (i32, i32) {
    %c0_i32 = arith.constant 0 : i32
    return %arg0, %arg1 : i32, i32
  }
  func.func @transform_1(%arg0: i32, %arg1: i32) -> (i32, i32) {
    %c0_i32 = arith.constant 0 : i32
    %c0_i32_0 = arith.constant 0 : i32
    return %arg0, %c0_i32 : i32, i32
  }
}

</mosaic_0001>

<llo_original>
// kernel: tpu_custom_call.1
$region0: #{tpu_custom_call.1}
  #allocation0 [shape = 'u32[]', space=smem, size = 0x4, offset = 0x4, fixed_abs, tag = 'smem constant byte address 0x4 - core index']
  #allocation1 [shape = 'u32[144,128]{1,0:T(1,128)}', space=vmem, size = 0x12000, scoped, tag = 'internal scratch']
  #allocation2 [shape = 'f32[16,1]{1,0:T(8,128)}', space=vmem, size = 0x2000, scoped, tag = 'scratch operand']
  #allocation3 [shape = 's32[16,1]{1,0:T(8,128)}', space=vmem, size = 0x2000, scoped, tag = 'scratch operand']
  %s0 = inlined_call_operand.hbm [shape: f32[16,2048], index: 0, kind: input, shape index: {}]
  %s1 = inlined_call_operand.vmem [shape: s32[16,1], index: 1, kind: output, shape index: {}]
  %s2 = sld [smem:[#allocation0]]
  $region30: #{tpu_custom_call.1} parent=0
    _
  %s4 = ssub.s32 1, %s2
  %s5 = scalar_select 0, %s4, %s2
  $region1: #{tpu_custom_call.1} parent=0
    #allocation4 [shape = 'u8[131072]{0}', space=vmem, size = 0x20000, scoped, tag = 'input window, operand 0, single buffered']
    #allocation5 [shape = 's32[1]{0}', space=sflag, size = 0x4, scoped, tag = 'scoped memory for tpu_custom_call.1']
    %6 = vsyncpa [#allocation5], 0
    // Predicated region
    $region2: #{tpu_custom_call.1} parent=1 // pred_check
      _
    $region3: #{tpu_custom_call.1} parent=1 // pred_check_branch
      %8 = sbr.rel (0) target = $region5
    $region4: #{tpu_custom_call.1} parent=1 // pred_region
      %s10 = ssub.s32 4096, 4096
      %11 = vsyncadd [#allocation5], %s10
      %s12 = sshll.u32 [#allocation4], 4
      %s13 = int_to_ptr.vmem [resolvable:$true] %s12
      %18 = dma.hbm_to_vmem [thread:$0]  %s0, 4096, %s13, [#allocation5], 2048, 2048, 128
    $region5: #{tpu_custom_call.1} parent=1 // pred_fallthru
      _
    // Predicated region
    $region6: #{tpu_custom_call.1} parent=1 // pred_check
      _
    $region7: #{tpu_custom_call.1} parent=1 // pred_check_branch
      %20 = sbr.rel (0) target = $region9
    $region8: #{tpu_custom_call.1} parent=1 // pred_region
      %21 = dma.done [#allocation5], 4096
    $region9: #{tpu_custom_call.1} parent=1 // pred_fallthru
      _
    %v22 = vld [vmem:[#allocation4] sm:$0xff]
    %v23 = vld [vmem:[#allocation4 + $0x8] sm:$0xff]
    %v24 = vld [vmem:[#allocation4 + $0x10] sm:$0xff]
    %v25 = vld [vmem:[#allocation4 + $0x18] sm:$0xff]
    %v26 = vld [vmem:[#allocation4 + $0x20] sm:$0xff]
    %v27 = vld [vmem:[#allocation4 + $0x28] sm:$0xff]
    %v28 = vld [vmem:[#allocation4 + $0x30] sm:$0xff]
    %v29 = vld [vmem:[#allocation4 + $0x38] sm:$0xff]
    %v30 = vld [vmem:[#allocation4 + $0x40] sm:$0xff]
    %v31 = vld [vmem:[#allocation4 + $0x48] sm:$0xff]
    %v32 = vld [vmem:[#allocation4 + $0x50] sm:$0xff]
    %v33 = vld [vmem:[#allocation4 + $0x58] sm:$0xff]
    %v34 = vld [vmem:[#allocation4 + $0x60] sm:$0xff]
    %v35 = vld [vmem:[#allocation4 + $0x68] sm:$0xff]
    %v36 = vld [vmem:[#allocation4 + $0x70] sm:$0xff]
    %v37 = vld [vmem:[#allocation4 + $0x78] sm:$0xff]
    %v38 = vld [vmem:[#allocation4 + $0x80] sm:$0xff]
    %v39 = vld [vmem:[#allocation4 + $0x88] sm:$0xff]
    %v40 = vld [vmem:[#allocation4 + $0x90] sm:$0xff]
    %v41 = vld [vmem:[#allocation4 + $0x98] sm:$0xff]
    %v42 = vld [vmem:[#allocation4 + $0xa0] sm:$0xff]
    %v43 = vld [vmem:[#allocation4 + $0xa8] sm:$0xff]
    %v44 = vld [vmem:[#allocation4 + $0xb0] sm:$0xff]
    %v45 = vld [vmem:[#allocation4 + $0xb8] sm:$0xff]
    %v46 = vld [vmem:[#allocation4 + $0xc0] sm:$0xff]
    %v47 = vld [vmem:[#allocation4 + $0xc8] sm:$0xff]
    %v48 = vld [vmem:[#allocation4 + $0xd0] sm:$0xff]
    %v49 = vld [vmem:[#allocation4 + $0xd8] sm:$0xff]
    %v50 = vld [vmem:[#allocation4 + $0xe0] sm:$0xff]
    %v51 = vld [vmem:[#allocation4 + $0xe8] sm:$0xff]
    %v52 = vld [vmem:[#allocation4 + $0xf0] sm:$0xff]
    %v53 = vld [vmem:[#allocation4 + $0xf8] sm:$0xff]
    %v54 = vmax.f32 %v22, %v24
    %v55 = vmax.f32 %v23, %v25
    %v56 = vmax.f32 %v54, %v26
    %v57 = vmax.f32 %v55, %v27
    %v58 = vmax.f32 %v56, %v28
    %v59 = vmax.f32 %v57, %v29
    %v60 = vmax.f32 %v58, %v30
    %v61 = vmax.f32 %v59, %v31
    %v62 = vmax.f32 %v60, %v32
    %v63 = vmax.f32 %v61, %v33
    %v64 = vmax.f32 %v62, %v34
    %v65 = vmax.f32 %v63, %v35
    %v66 = vmax.f32 %v64, %v36
    %v67 = vmax.f32 %v65, %v37
    %v68 = vmax.f32 %v66, %v67
    %69 = vmax.xlane.f32.xlu0 %v68
    %v70 = vpop.xlane.xlu0 %69
    %v71 = vmax.f32 %v38, %v40
    %v72 = vmax.f32 %v39, %v41
    %v73 = vmax.f32 %v71, %v42
    %v74 = vmax.f32 %v72, %v43
    %v75 = vmax.f32 %v73, %v44
    %v76 = vmax.f32 %v74, %v45
    %v77 = vmax.f32 %v75, %v46
    %v78 = vmax.f32 %v76, %v47
    %v79 = vmax.f32 %v77, %v48
    %v80 = vmax.f32 %v78, %v49
    %v81 = vmax.f32 %v79, %v50
    %v82 = vmax.f32 %v80, %v51
    %v83 = vmax.f32 %v81, %v52
    %v84 = vmax.f32 %v82, %v53
    %v85 = vmax.f32 %v83, %v84
    %86 = vmax.xlane.f32.xlu0 %v85
    %v87 = vpop.xlane.xlu0 %86
    %v88 = vlaneseq
    %v89 = vand.u32 %v88, 127
    %v90 = vadd.s32 %v89, 128
    %v91 = vadd.s32 %v89, 256
    %v92 = vadd.s32 %v89, 384
    %v93 = vadd.s32 %v89, 512
    %v94 = vadd.s32 %v89, 640
    %v95 = vadd.s32 %v89, 768
    %v96 = vadd.s32 %v89, 896
    %v97 = vadd.s32 %v89, 1024
    %v98 = vadd.s32 %v89, 1152
    %v99 = vadd.s32 %v89, 1280
    %v100 = vadd.s32 %v89, 1408
    %v101 = vadd.s32 %v89, 1536
    %v102 = vadd.s32 %v89, 1664
    %v103 = vadd.s32 %v89, 1792
    %v104 = vadd.s32 %v89, 1920
    %s105 = smul.u32 0, 2048
    %v106 = vstv %s105
    %v107 = vadd.s32 %v89, %v106
    %v108 = vadd.s32 %v90, %v106
    %v109 = vadd.s32 %v91, %v106
    %v110 = vadd.s32 %v92, %v106
    %v111 = vadd.s32 %v93, %v106
    %v112 = vadd.s32 %v94, %v106
    %v113 = vadd.s32 %v95, %v106
    %v114 = vadd.s32 %v96, %v106
    %v115 = vadd.s32 %v97, %v106
    %v116 = vadd.s32 %v98, %v106
    %v117 = vadd.s32 %v99, %v106
    %v118 = vadd.s32 %v100, %v106
    %v119 = vadd.s32 %v101, %v106
    %v120 = vadd.s32 %v102, %v106
    %v121 = vadd.s32 %v103, %v106
    %v122 = vadd.s32 %v104, %v106
    %vm123 = vcmp.eq.f32.partialorder %v22, %v70
    %vm124 = vcmp.eq.f32.partialorder %v23, %v70
    %vm125 = vcmp.eq.f32.partialorder %v24, %v70
    %vm126 = vcmp.eq.f32.partialorder %v25, %v70
    %vm127 = vcmp.eq.f32.partialorder %v26, %v70
    %vm128 = vcmp.eq.f32.partialorder %v27, %v70
    %vm129 = vcmp.eq.f32.partialorder %v28, %v70
    %vm130 = vcmp.eq.f32.partialorder %v29, %v70
    %vm131 = vcmp.eq.f32.partialorder %v30, %v70
    %vm132 = vcmp.eq.f32.partialorder %v31, %v70
    %vm133 = vcmp.eq.f32.partialorder %v32, %v70
    %vm134 = vcmp.eq.f32.partialorder %v33, %v70
    %vm135 = vcmp.eq.f32.partialorder %v34, %v70
    %vm136 = vcmp.eq.f32.partialorder %v35, %v70
    %vm137 = vcmp.eq.f32.partialorder %v36, %v70
    %vm138 = vcmp.eq.f32.partialorder %v37, %v70
    %vm139 = vcmp.eq.f32.partialorder %v38, %v87
    %vm140 = vcmp.eq.f32.partialorder %v39, %v87
    %vm141 = vcmp.eq.f32.partialorder %v40, %v87
    %vm142 = vcmp.eq.f32.partialorder %v41, %v87
    %vm143 = vcmp.eq.f32.partialorder %v42, %v87
    %vm144 = vcmp.eq.f32.partialorder %v43, %v87
    %vm145 = vcmp.eq.f32.partialorder %v44, %v87
    %vm146 = vcmp.eq.f32.partialorder %v45, %v87
    %vm147 = vcmp.eq.f32.partialorder %v46, %v87
    %vm148 = vcmp.eq.f32.partialorder %v47, %v87
    %vm149 = vcmp.eq.f32.partialorder %v48, %v87
    %vm150 = vcmp.eq.f32.partialorder %v49, %v87
    %vm151 = vcmp.eq.f32.partialorder %v50, %v87
    %vm152 = vcmp.eq.f32.partialorder %v51, %v87
    %vm153 = vcmp.eq.f32.partialorder %v52, %v87
    %vm154 = vcmp.eq.f32.partialorder %v53, %v87
    %v155 = vsel %vm123, %v107, 2048
    %v156 = vsel %vm124, %v108, 2048
    %v157 = vsel %vm125, %v109, 2048
    %v158 = vsel %vm126, %v110, 2048
    %v159 = vsel %vm127, %v111, 2048
    %v160 = vsel %vm128, %v112, 2048
    %v161 = vsel %vm129, %v113, 2048
    %v162 = vsel %vm130, %v114, 2048
    %v163 = vsel %vm131, %v115, 2048
    %v164 = vsel %vm132, %v116, 2048
    %v165 = vsel %vm133, %v117, 2048
    %v166 = vsel %vm134, %v118, 2048
    %v167 = vsel %vm135, %v119, 2048
    %v168 = vsel %vm136, %v120, 2048
    %v169 = vsel %vm137, %v121, 2048
    %v170 = vsel %vm138, %v122, 2048
    %v171 = vsel %vm139, %v107, 2048
    %v172 = vsel %vm140, %v108, 2048
    %v173 = vsel %vm141, %v109, 2048
    %v174 = vsel %vm142, %v110, 2048
    %v175 = vsel %vm143, %v111, 2048
    %v176 = vsel %vm144, %v112, 2048
    %v177 = vsel %vm145, %v113, 2048
    %v178 = vsel %vm146, %v114, 2048
    %v179 = vsel %vm147, %v115, 2048
    %v180 = vsel %vm148, %v116, 2048
    %v181 = vsel %vm149, %v117, 2048
    %v182 = vsel %vm150, %v118, 2048
    %v183 = vsel %vm151, %v119, 2048
    %v184 = vsel %vm152, %v120, 2048
    %v185 = vsel %vm153, %v121, 2048
    %v186 = vsel %vm154, %v122, 2048
    %vm187 = vcmp.lt.s32.totalorder %v155, %v157
    %v188 = vsel %vm187, %v155, %v157
    %vm189 = vcmp.lt.s32.totalorder %v156, %v158
    %v190 = vsel %vm189, %v156, %v158
    %vm191 = vcmp.lt.s32.totalorder %v188, %v159
    %v192 = vsel %vm191, %v188, %v159
    %vm193 = vcmp.lt.s32.totalorder %v190, %v160
    %v194 = vsel %vm193, %v190, %v160
    %vm195 = vcmp.lt.s32.totalorder %v192, %v161
    %v196 = vsel %vm195, %v192, %v161
    %vm197 = vcmp.lt.s32.totalorder %v194, %v162
    %v198 = vsel %vm197, %v194, %v162
    %vm199 = vcmp.lt.s32.totalorder %v196, %v163
    %v200 = vsel %vm199, %v196, %v163
    %vm201 = vcmp.lt.s32.totalorder %v198, %v164
    %v202 = vsel %vm201, %v198, %v164
    %vm203 = vcmp.lt.s32.totalorder %v200, %v165
    %v204 = vsel %vm203, %v200, %v165
    %vm205 = vcmp.lt.s32.totalorder %v202, %v166
    %v206 = vsel %vm205, %v202, %v166
    %vm207 = vcmp.lt.s32.totalorder %v204, %v167
    %v208 = vsel %vm207, %v204, %v167
    %vm209 = vcmp.lt.s32.totalorder %v206, %v168
    %v210 = vsel %vm209, %v206, %v168
    %vm211 = vcmp.lt.s32.totalorder %v208, %v169
    %v212 = vsel %vm211, %v208, %v169
    %vm213 = vcmp.lt.s32.totalorder %v210, %v170
    %v214 = vsel %vm213, %v210, %v170
    %vm215 = vcmp.lt.s32.totalorder %v212, %v214
    %v216 = vsel %vm215, %v212, %v214
    %v217 = vand.u32 %v216, 65535
    %v218 = vshra.s32 %v216, 16
    %v219 = vcvt.s32.f32 %v217
    %v220 = vcvt.s32.f32 %v218
    %221 = vmin.xlane.f32.xlu0 %v220
    %v222 = vpop.xlane.xlu0 %221
    %vm223 = vcmp.eq.f32.partialorder %v220, %v222
    %v224 = vsel %vm223, %v219, inf
    %225 = vmin.xlane.f32.xlu0 %v224
    %v226 = vpop.xlane.xlu0 %225
    %v227 = vcvt.f32.s32 %v226
    %v228 = vcvt.f32.s32 %v222
    %v229 = vshll.u32 %v228, 16
    %v230 = vadd.s32 %v229, %v227
    %vm231 = vcmp.lt.s32.totalorder %v171, %v173
    %v232 = vsel %vm231, %v171, %v173
    %vm233 = vcmp.lt.s32.totalorder %v172, %v174
    %v234 = vsel %vm233, %v172, %v174
    %vm235 = vcmp.lt.s32.totalorder %v232, %v175
    %v236 = vsel %vm235, %v232, %v175
    %vm237 = vcmp.lt.s32.totalorder %v234, %v176
    %v238 = vsel %vm237, %v234, %v176
    %vm239 = vcmp.lt.s32.totalorder %v236, %v177
    %v240 = vsel %vm239, %v236, %v177
    %vm241 = vcmp.lt.s32.totalorder %v238, %v178
    %v242 = vsel %vm241, %v238, %v178
    %vm243 = vcmp.lt.s32.totalorder %v240, %v179
    %v244 = vsel %vm243, %v240, %v179
    %vm245 = vcmp.lt.s32.totalorder %v242, %v180
    %v246 = vsel %vm245, %v242, %v180
    %vm247 = vcmp.lt.s32.totalorder %v244, %v181
    %v248 = vsel %vm247, %v244, %v181
    %vm249 = vcmp.lt.s32.totalorder %v246, %v182
    %v250 = vsel %vm249, %v246, %v182
    %vm251 = vcmp.lt.s32.totalorder %v248, %v183
    %v252 = vsel %vm251, %v248, %v183
    %vm253 = vcmp.lt.s32.totalorder %v250, %v184
    %v254 = vsel %vm253, %v250, %v184
    %vm255 = vcmp.lt.s32.totalorder %v252, %v185
    %v256 = vsel %vm255, %v252, %v185
    %vm257 = vcmp.lt.s32.totalorder %v254, %v186
    %v258 = vsel %vm257, %v254, %v186
    %vm259 = vcmp.lt.s32.totalorder %v256, %v258
    %v260 = vsel %vm259, %v256, %v258
    %v261 = vand.u32 %v260, 65535
    %v262 = vshra.s32 %v260, 16
    %v263 = vcvt.s32.f32 %v261
    %v264 = vcvt.s32.f32 %v262
    %265 = vmin.xlane.f32.xlu0 %v264
    %v266 = vpop.xlane.xlu0 %265
    %vm267 = vcmp.eq.f32.partialorder %v264, %v266
    %v268 = vsel %vm267, %v263, inf
    %269 = vmin.xlane.f32.xlu0 %v268
    %v270 = vpop.xlane.xlu0 %269
    %v271 = vcvt.f32.s32 %v270
    %v272 = vcvt.f32.s32 %v266
    %v273 = vshll.u32 %v272, 16
    %v274 = vadd.s32 %v273, %v271
    %p275 = scmp.eq.s32.totalorder 0, 0
    // Predicated region
    $region10: #{tpu_custom_call.1} parent=1 // pred_check
      %p276 = pneg %p275
    $region11: #{tpu_custom_call.1} parent=1 // pred_check_branch
      %278 = sbr.rel (%p276) target = $region13
    $region12: #{tpu_custom_call.1} parent=1 // pred_region
      %vm279 = vcmask 7168
      %280 = vst.msk [vmem:[#allocation2] sm:$0xff] %vm279, %v70
      %281 = vst.msk [vmem:[#allocation2 + $0x8] sm:$0xff] %vm279, %v87
      %282 = vst.msk [vmem:[#allocation3] sm:$0xff] %vm279, %v230
      %283 = vst.msk [vmem:[#allocation3 + $0x8] sm:$0xff] %vm279, %v274
    $region13: #{tpu_custom_call.1} parent=1 // pred_fallthru
      _
    %p284 = scmp.gt.s32.totalorder 0, 0
    // Predicated region
    $region14: #{tpu_custom_call.1} parent=1 // pred_check
      %p285 = pneg %p284
    $region15: #{tpu_custom_call.1} parent=1 // pred_check_branch
      %287 = sbr.rel (%p285) target = $region17
    $region16: #{tpu_custom_call.1} parent=1 // pred_region
      %v288 = vld [vmem:[#allocation2] sm:$0xff]
      %v289 = vld [vmem:[#allocation2 + $0x8] sm:$0xff]
      %vm290 = vcmp.gt.f32.partialorder %v70, %v288
      %vm291 = vcmp.gt.f32.partialorder %v87, %v289
      %v292 = vsel %vm290, %v70, %v288
      %v293 = vsel %vm291, %v87, %v289
      %vm294 = vcmask 7168
      %295 = vst.msk [vmem:[#allocation2] sm:$0xff] %vm294, %v292
      %296 = vst.msk [vmem:[#allocation2 + $0x8] sm:$0xff] %vm294, %v293
      %v297 = vld [vmem:[#allocation3] sm:$0xff]
      %v298 = vld [vmem:[#allocation3 + $0x8] sm:$0xff]
      %v299 = vsel %vm290, %v230, %v297
      %v300 = vsel %vm291, %v274, %v298
      %301 = vst.msk [vmem:[#allocation3] sm:$0xff] %vm294, %v299
      %302 = vst.msk [vmem:[#allocation3 + $0x8] sm:$0xff] %vm294, %v300
    $region17: #{tpu_custom_call.1} parent=1 // pred_fallthru
      _
    // Predicated region
    $region18: #{tpu_custom_call.1} parent=1 // pred_check
      %p303 = pneg %p275
    $region19: #{tpu_custom_call.1} parent=1 // pred_check_branch
      %305 = sbr.rel (%p303) target = $region21
    $region20: #{tpu_custom_call.1} parent=1 // pred_region
      %v306 = vld [vmem:[#allocation3] sm:$0xff]
      %v307 = vld [vmem:[#allocation3 + $0x8] sm:$0xff]
      %vm308 = vcmask 7168
      %309 = vst.msk [vmem:[%s1] sm:$0xff] %vm308, %v306
      %310 = vst.msk [vmem:[%s1 + $0x8] sm:$0xff] %vm308, %v307
    $region21: #{tpu_custom_call.1} parent=1 // pred_fallthru
      _
    // Predicated region
    $region22: #{tpu_custom_call.1} parent=1 // pred_check
      _
    $region23: #{tpu_custom_call.1} parent=1 // pred_check_branch
      %312 = sbr.rel (0) target = $region25
    $region24: #{tpu_custom_call.1} parent=1 // pred_region
      _
    $region25: #{tpu_custom_call.1} parent=1 // pred_fallthru
      _
    // Predicated region
    $region26: #{tpu_custom_call.1} parent=1 // pred_check
      _
    $region27: #{tpu_custom_call.1} parent=1 // pred_check_branch
      %314 = sbr.rel (0) target = $region29
    $region28: #{tpu_custom_call.1} parent=1 // pred_region
      _
    $region29: #{tpu_custom_call.1} parent=1 // pred_fallthru
      _
    %315 = vsyncpa [#allocation5], 1

</llo_original>
